<compile_context>
chip_gen: v7x
topology: tpu7x:2x2x1
jax: 0.10.0
libtpu: 0.0.40
codegen_flags: <defaults>
</compile_context>

<pallas_src>
import jax
import jax.numpy as jnp
from jax.experimental import pallas as pl
from jax.experimental.pallas import tpu as pltpu


_LANES = 128
# Per-sample VMEM: ~18 KB bf16 patches (double-buffered) + ~8 KB f32 feat
# + 0.5 KB f32 out  =>  b_tile=128 is ~6 MB, safe on v5e/v6e/v7x.
_MAX_B_TILE = 128


def _fused_kernel(p_ref, cw_ref, cb_ref, hw_ref, hb_ref, o_ref):
    """im2col-conv3x3 + bias + ReLU + global-avg-pool + Linear, one batch tile.

    p_ref : (B, HW, 9*Cin) bf16  im2col patches (tap-major, Cin-minor)
    cw_ref: (9*Cin, Cmid)  bf16  conv weight in matching order
    cb_ref: (1, Cmid)      f32   conv bias
    hw_ref: (Cmid, 128)    bf16  head weight^T with 1/HW folded in, class-padded
    hb_ref: (1, 128)       f32   head bias, class-padded
    o_ref : (B, 128)       f32   lane-dense logits slab
    """
    b, hw, k = p_ref.shape
    cmid = cw_ref.shape[1]

    # Single K=36 im2col matmul: no per-tap window relayouts, one MXU chain.
    patches = p_ref[...].reshape(b * hw, k)                       # bf16
    feat = jnp.dot(patches, cw_ref[...],
                   preferred_element_type=jnp.float32)            # (B*HW, Cmid) f32
    feat = jnp.maximum(feat + cb_ref[...], 0.0)                   # f32 epilogue

    # Global average pool as a plain sum; the 1/HW scale lives in hw_ref.
    # TODO(synk): if b_tile is ever raised well past 128, pool strip-wise over H
    # instead of materializing the full (B*HW, Cmid) feat; unnecessary here.
    pooled = feat.reshape(b, hw, cmid).sum(axis=1)                # (B, Cmid) f32

    # Head matmul with bf16 operands (single MXU pass), f32 accumulate + bias.
    logits = jnp.dot(pooled.astype(jnp.bfloat16), hw_ref[...],
                     preferred_element_type=jnp.float32) + hb_ref[...]
    o_ref[...] = logits.astype(o_ref.dtype)                       # (B, 128) lane-dense


def _pick_b_tile(n):
    if n <= 8:
        # Single grid step; block == full extent so no (8,128) padding rules bite.
        return n
    # >= 2 programs so both v7x TensorCores get work; 8-aligned tiles, capped so
    # the double-buffered tile fits v5e's 16 MiB scoped-VMEM default.
    half = -(-n // 2)
    return min(_MAX_B_TILE, ((half + 7) // 8) * 8)


@jax.jit
def modified_model_forward(x_nchw, conv_w, conv_b, head_w, head_b):
    """Forward pass of ModifiedModel.

    x_nchw : (N, Cin, H, W)     PyTorch-style input
    conv_w : (Cmid, Cin, 3, 3)  PyTorch Conv2d weight layout
    conv_b : (Cmid,)
    head_w : (Ncls, Cmid)       PyTorch Linear weight layout
    head_b : (Ncls,)
    returns: (N, Ncls) logits (f32)
    """
    n, c_in, h, w = x_nchw.shape
    c_mid = conv_w.shape[0]
    n_cls = head_w.shape[0]
    hw = h * w
    k = 9 * c_in
    ncls_pad = ((n_cls + _LANES - 1) // _LANES) * _LANES

    # Wrapper-side im2col, fused in XLA: NCHW -> NHWC, zero-pad for 'same' 3x3,
    # 9 tap views concatenated on the channel axis, bf16 for the (only) DMA.
    x_nhwc = jnp.transpose(x_nchw, (0, 2, 3, 1))
    xp = jnp.pad(x_nhwc, ((0, 0), (1, 1), (1, 1), (0, 0)))
    taps = [xp[:, kh:kh + h, kw:kw + w, :] for kh in range(3) for kw in range(3)]
    patches = jnp.concatenate(taps, axis=-1).reshape(n, hw, k).astype(jnp.bfloat16)

    # Conv weight (Cout, Cin, kh, kw) -> (kh, kw, Cin, Cout) -> (9*Cin, Cout),
    # matching the tap-major / Cin-minor patch ordering above.
    cw = jnp.transpose(conv_w, (2, 3, 1, 0)).reshape(k, c_mid).astype(jnp.bfloat16)
    cb = conv_b.reshape(1, c_mid).astype(jnp.float32)

    # Head: logits = mean_pool(feat) @ W^T + b.  Fold the 1/HW pool scale into
    # W^T, keep it bf16, and zero-pad the class dim to 128 lanes (sliced below).
    hw_mat = jnp.pad(jnp.transpose(head_w, (1, 0)).astype(jnp.float32) / float(hw),
                     ((0, 0), (0, ncls_pad - n_cls))).astype(jnp.bfloat16)
    hb_mat = jnp.pad(head_b.astype(jnp.float32).reshape(1, n_cls),
                     ((0, 0), (0, ncls_pad - n_cls)))

    b_tile = _pick_b_tile(n)
    n_pad = pl.cdiv(n, b_tile) * b_tile
    if n_pad != n:
        # Pad the batch so every grid block is full (tail rows sliced off below).
        patches = jnp.pad(patches, ((0, n_pad - n), (0, 0), (0, 0)))
    grid = (n_pad // b_tile,)

    out = pl.pallas_call(
        _fused_kernel,
        out_shape=jax.ShapeDtypeStruct((n_pad, ncls_pad), jnp.float32),
        grid_spec=pltpu.PrefetchScalarGridSpec(
            num_scalar_prefetch=0,
            grid=grid,
            in_specs=[
                pl.BlockSpec((b_tile, hw, k), lambda b: (b, 0, 0)),
                pl.BlockSpec((k, c_mid), lambda b: (0, 0)),
                pl.BlockSpec((1, c_mid), lambda b: (0, 0)),
                pl.BlockSpec((c_mid, ncls_pad), lambda b: (0, 0)),
                pl.BlockSpec((1, ncls_pad), lambda b: (0, 0)),
            ],
            out_specs=pl.BlockSpec((b_tile, ncls_pad), lambda b: (b, 0)),
        ),
        compiler_params=pltpu.CompilerParams(
            dimension_semantics=("parallel",),
            vmem_limit_bytes=64 * 1024 * 1024),
    )(patches, cw, cb, hw_mat, hb_mat)

    return out[:n, :n_cls]


def _reference_forward(x_nchw, conv_w, conv_b, head_w, head_b):
    """Pure-JAX f32 reference (mirrors PyTorch semantics)."""
    feat = jax.lax.conv_general_dilated(
        x_nchw.astype(jnp.float32), conv_w.astype(jnp.float32),
        window_strides=(1, 1), padding="SAME",
        dimension_numbers=("NCHW", "OIHW", "NCHW"))
    feat = jnp.maximum(feat + conv_b.reshape(1, -1, 1, 1), 0.0)
    pooled = jnp.mean(feat, axis=(2, 3))                  # (N, Cmid)
    return pooled @ head_w.T + head_b


def _mirrored_reference(x_nchw, conv_w, conv_b, head_w, head_b):
    """Reference with the SAME bf16 quantization points as the kernel."""
    hw = x_nchw.shape[2] * x_nchw.shape[3]
    xq = x_nchw.astype(jnp.bfloat16).astype(jnp.float32)
    cwq = conv_w.astype(jnp.bfloat16).astype(jnp.float32)
    feat = jax.lax.conv_general_dilated(
        xq, cwq, window_strides=(1, 1), padding="SAME",
        dimension_numbers=("NCHW", "OIHW", "NCHW"))
    feat = jnp.maximum(feat + conv_b.reshape(1, -1, 1, 1).astype(jnp.float32), 0.0)
    pooled_sum = jnp.sum(feat, axis=(2, 3)).astype(jnp.bfloat16).astype(jnp.float32)
    hwq = (head_w.T.astype(jnp.float32) / float(hw)).astype(jnp.bfloat16).astype(jnp.float32)
    return pooled_sum @ hwq + head_b.astype(jnp.float32)


if __name__ == "__main__":
    key = jax.random.PRNGKey(0)
    k_x, k_cw, k_cb, k_hw, k_hb = jax.random.split(key, 5)

    N, C_IN, H, W = 2, 4, 16, 16
    C_MID, N_CLS = 8, 10

    x = jax.random.normal(k_x, (N, C_IN, H, W), dtype=jnp.float32)
    conv_w = jax.random.normal(k_cw, (C_MID, C_IN, 3, 3), dtype=jnp.float32) * 0.1
    conv_b = jax.random.normal(k_cb, (C_MID,), dtype=jnp.float32) * 0.1
    head_w = jax.random.normal(k_hw, (N_CLS, C_MID), dtype=jnp.float32) * 0.1
    head_b = jax.random.normal(k_hb, (N_CLS,), dtype=jnp.float32) * 0.1

    out = jax.block_until_ready(
        modified_model_forward(x, conv_w, conv_b, head_w, head_b))
    assert out.shape == (N, N_CLS)

    # Loose check vs the pure-f32 reference (kernel quantizes x / conv_w /
    # pooled / head weight to bf16; accumulation and epilogue are f32).
    ref = jax.block_until_ready(_reference_forward(x, conv_w, conv_b, head_w, head_b))
    assert jnp.allclose(out, ref, atol=2e-2, rtol=2e-2), "mismatch vs f32 reference"

    # Tight check vs a reference that mirrors the kernel's quantization points:
    # only f32 accumulation-order differences remain.
    ref_q = jax.block_until_ready(
        _mirrored_reference(x, conv_w, conv_b, head_w, head_b))
    assert jnp.allclose(out, ref_q, atol=1e-3, rtol=1e-3), \
        "mismatch vs quantization-mirrored reference"

    print("KERNEL_OK")
</pallas_src>

<mosaic_0001>
module attributes {stable_mosaic.version = 11 : i64} {
  func.func @_fused_kernel(%arg0: i32, %arg1: memref<2x256x36xbf16, #tpu.memory_space<vmem>>, %arg2: memref<36x8xbf16, #tpu.memory_space<vmem>>, %arg3: memref<1x8xf32, #tpu.memory_space<vmem>>, %arg4: memref<8x128xbf16, #tpu.memory_space<vmem>>, %arg5: memref<1x128xf32, #tpu.memory_space<vmem>>, %arg6: memref<2x128xf32, #tpu.memory_space<vmem>>) attributes {dimension_semantics = [#tpu.dimension_semantics<parallel>], iteration_bounds = array<i64: 1>, scalar_prefetch = 0 : i64, scratch_operands = 0 : i64, tpu.core_type = #tpu.core_type<tc>, window_params = [{transform_indices = @transform_0, window_bounds = array<i64: 2, 256, 36>}, {pipeline_mode = #tpu.pipeline_mode<synchronous>, transform_indices = @transform_1, window_bounds = array<i64: 36, 8>}, {pipeline_mode = #tpu.pipeline_mode<synchronous>, transform_indices = @transform_2, window_bounds = array<i64: 1, 8>}, {pipeline_mode = #tpu.pipeline_mode<synchronous>, transform_indices = @transform_3, window_bounds = array<i64: 8, 128>}, {pipeline_mode = #tpu.pipeline_mode<synchronous>, transform_indices = @transform_4, window_bounds = array<i64: 1, 128>}, {transform_indices = @transform_5, window_bounds = array<i64: 2, 128>}]} {
    %c0 = arith.constant 0 : index
    %c0_0 = arith.constant 0 : index
    %c0_1 = arith.constant 0 : index
    %0 = vector.load %arg1[%c0, %c0_0, %c0_1] : memref<2x256x36xbf16, #tpu.memory_space<vmem>>, vector<2x256x36xbf16>
    %1 = vector.shape_cast %0 : vector<2x256x36xbf16> to vector<512x36xbf16>
    %c0_2 = arith.constant 0 : index
    %c0_3 = arith.constant 0 : index
    %2 = vector.load %arg2[%c0_2, %c0_3] : memref<36x8xbf16, #tpu.memory_space<vmem>>, vector<36x8xbf16>
    %cst = arith.constant dense<0.000000e+00> : vector<512x8xf32>
    %3 = tpu.matmul %1, %2, %cst {dimension_numbers = #tpu.dot_dimension_numbers<[1], [0], [0], [1], [0, 0, 1, 1], [], []>} : vector<512x36xbf16>, vector<36x8xbf16>, vector<512x8xf32> -> vector<512x8xf32>
    %c0_4 = arith.constant 0 : index
    %c0_5 = arith.constant 0 : index
    %4 = vector.load %arg3[%c0_4, %c0_5] : memref<1x8xf32, #tpu.memory_space<vmem>>, vector<1x8xf32>
    %5 = vector.broadcast %4 : vector<1x8xf32> to vector<512x8xf32>
    %6 = arith.addf %3, %5 : vector<512x8xf32>
    %cst_6 = arith.constant 0.000000e+00 : f32
    %7 = vector.broadcast %cst_6 : f32 to vector<512x8xf32>
    %8 = arith.maximumf %6, %7 : vector<512x8xf32>
    %9 = vector.shape_cast %8 : vector<512x8xf32> to vector<2x256x8xf32>
    %cst_7 = arith.constant dense<0.000000e+00> : vector<2x8xf32>
    %10 = vector.multi_reduction <add>, %9, %cst_7 [1] : vector<2x256x8xf32> to vector<2x8xf32>
    %11 = arith.truncf %10 : vector<2x8xf32> to vector<2x8xbf16>
    %c0_8 = arith.constant 0 : index
    %c0_9 = arith.constant 0 : index
    %12 = vector.load %arg4[%c0_8, %c0_9] : memref<8x128xbf16, #tpu.memory_space<vmem>>, vector<8x128xbf16>
    %cst_10 = arith.constant dense<0.000000e+00> : vector<2x128xf32>
    %13 = tpu.matmul %11, %12, %cst_10 {dimension_numbers = #tpu.dot_dimension_numbers<[1], [0], [0], [1], [0, 0, 1, 1], [], []>} : vector<2x8xbf16>, vector<8x128xbf16>, vector<2x128xf32> -> vector<2x128xf32>
    %c0_11 = arith.constant 0 : index
    %c0_12 = arith.constant 0 : index
    %14 = vector.load %arg5[%c0_11, %c0_12] : memref<1x128xf32, #tpu.memory_space<vmem>>, vector<1x128xf32>
    %15 = vector.broadcast %14 : vector<1x128xf32> to vector<2x128xf32>
    %16 = arith.addf %13, %15 : vector<2x128xf32>
    %c0_13 = arith.constant 0 : index
    %c0_14 = arith.constant 0 : index
    %17 = vector.load %arg6[%c0_13, %c0_14] : memref<2x128xf32, #tpu.memory_space<vmem>>, vector<2x128xf32>
    tpu.vector_store %arg6[%c0_13, %c0_14], %16 {strides = array<i32>} : memref<2x128xf32, #tpu.memory_space<vmem>>, vector<2x128xf32>,
    return
  }
  func.func @transform_0(%arg0: i32) -> (i32, i32, i32) {
    %c0_i32 = arith.constant 0 : i32
    %c0_i32_0 = arith.constant 0 : i32
    %c0_i32_1 = arith.constant 0 : i32
    return %arg0, %c0_i32, %c0_i32_0 : i32, i32, i32
  }
  func.func @transform_1(%arg0: i32) -> (i32, i32) {
    %c0_i32 = arith.constant 0 : i32
    %c0_i32_0 = arith.constant 0 : i32
    %c0_i32_1 = arith.constant 0 : i32
    return %c0_i32, %c0_i32_0 : i32, i32
  }
  func.func @transform_2(%arg0: i32) -> (i32, i32) {
    %c0_i32 = arith.constant 0 : i32
    %c0_i32_0 = arith.constant 0 : i32
    %c0_i32_1 = arith.constant 0 : i32
    return %c0_i32, %c0_i32_0 : i32, i32
  }
  func.func @transform_3(%arg0: i32) -> (i32, i32) {
    %c0_i32 = arith.constant 0 : i32
    %c0_i32_0 = arith.constant 0 : i32
    %c0_i32_1 = arith.constant 0 : i32
    return %c0_i32, %c0_i32_0 : i32, i32
  }
  func.func @transform_4(%arg0: i32) -> (i32, i32) {
    %c0_i32 = arith.constant 0 : i32
    %c0_i32_0 = arith.constant 0 : i32
    %c0_i32_1 = arith.constant 0 : i32
    return %c0_i32, %c0_i32_0 : i32, i32
  }
  func.func @transform_5(%arg0: i32) -> (i32, i32) {
    %c0_i32 = arith.constant 0 : i32
    %c0_i32_0 = arith.constant 0 : i32
    return %arg0, %c0_i32 : i32, i32
  }
}

</mosaic_0001>

<llo_original>
// kernel: modified_model_forward.1
$region0: #{modified_model_forward.1}
  #allocation0 [shape = 'u32[]', space=smem, size = 0x4, offset = 0x4, fixed_abs, tag = 'smem constant byte address 0x4 - core index']
  #allocation1 [shape = 'u32[144,128]{1,0:T(1,128)}', space=vmem, size = 0x12000, scoped, tag = 'internal scratch']
  %s0 = inlined_call_operand.hbm [shape: bf16[2,256,36], index: 0, kind: input, shape index: {}]
  %s1 = inlined_call_operand.hbm [shape: bf16[36,8], index: 1, kind: input, shape index: {}]
  %s2 = inlined_call_operand.hbm [shape: f32[1,8], index: 2, kind: input, shape index: {}]
  %s3 = inlined_call_operand.hbm [shape: bf16[8,128], index: 3, kind: input, shape index: {}]
  %s4 = inlined_call_operand.hbm [shape: f32[1,128], index: 4, kind: input, shape index: {}]
  %s5 = inlined_call_operand.hbm [shape: f32[2,128], index: 5, kind: output, shape index: {}]
  %s6 = sld [smem:[#allocation0]]
  $region50: #{modified_model_forward.1} parent=0
    _
  %s8 = ssub.s32 1, %s6
  %s9 = scalar_select 0, %s8, %s6
  $region1: #{modified_model_forward.1} parent=0
    #allocation2 [shape = 'u8[131072]{0}', space=vmem, size = 0x20000, scoped, tag = 'input window, operand 0, single buffered']
    #allocation3 [shape = 's32[1]{0}', space=sflag, size = 0x4, scoped, tag = 'scoped memory for modified_model_forward.1']
    #allocation4 [shape = 's32[1]{0}', space=sflag, size = 0x4, scoped, tag = 'scoped memory for modified_model_forward.1']
    #allocation5 [shape = 'u8[10240]{0}', space=vmem, size = 0x2800, scoped, tag = 'input window, operand 1, single buffered']
    #allocation6 [shape = 's32[1]{0}', space=sflag, size = 0x4, scoped, tag = 'scoped memory for modified_model_forward.1']
    #allocation7 [shape = 'u8[512]{0}', space=vmem, size = 0x400, scoped, tag = 'input window, operand 2, single buffered']
    #allocation8 [shape = 'u8[2048]{0}', space=vmem, size = 0x800, scoped, tag = 'input window, operand 3, single buffered']
    #allocation9 [shape = 's32[1]{0}', space=sflag, size = 0x4, scoped, tag = 'scoped memory for modified_model_forward.1']
    #allocation10 [shape = 'u8[512]{0}', space=vmem, size = 0x400, scoped, tag = 'input window, operand 4, single buffered']
    #allocation11 [shape = 'u8[1024]{0}', space=vmem, size = 0x400, scoped, tag = 'output window, operand 0, single buffered']
    %10 = vsyncpa [#allocation3], 0
    %11 = vsyncpa [#allocation6], 0
    %12 = vsyncpa [#allocation9], 0
    %13 = vsyncpa [#allocation4], 0
    // Predicated region
    $region2: #{modified_model_forward.1} parent=1 // pred_check
      _
    $region3: #{modified_model_forward.1} parent=1 // pred_check_branch
      %15 = sbr.rel (0) target = $region5
    $region4: #{modified_model_forward.1} parent=1 // pred_region
      %s17 = ssub.s32 4096, 4096
      %18 = vsyncadd [#allocation3], %s17
      %s19 = sshll.u32 [#allocation2], 4
      %s20 = int_to_ptr.vmem [resolvable:$true] %s19
      %25 = dma.hbm_to_vmem [thread:$0]  %s0, 4096, %s20, [#allocation3], 64, 64, 4
    $region5: #{modified_model_forward.1} parent=1 // pred_fallthru
      _
    // Predicated region
    $region6: #{modified_model_forward.1} parent=1 // pred_check
      _
    $region7: #{modified_model_forward.1} parent=1 // pred_check_branch
      %27 = sbr.rel (0) target = $region9
    $region8: #{modified_model_forward.1} parent=1 // pred_region
      %s29 = ssub.s32 320, 320
      %30 = vsyncadd [#allocation6], %s29
      %s31 = sshll.u32 [#allocation5], 4
      %s32 = int_to_ptr.vmem [resolvable:$true] %s31
      %37 = dma.hbm_to_vmem [thread:$0]  %s1, 320, %s32, [#allocation6], 64, 64, 4
    $region9: #{modified_model_forward.1} parent=1 // pred_fallthru
      _
    // Predicated region
    $region10: #{modified_model_forward.1} parent=1 // pred_check
      _
    $region11: #{modified_model_forward.1} parent=1 // pred_check_branch
      %39 = sbr.rel (0) target = $region13
    $region12: #{modified_model_forward.1} parent=1 // pred_region
      %s41 = ssub.s32 16, 16
      %42 = vsyncadd [#allocation6], %s41
      %s44 = sshll.u32 [#allocation7], 4
      %s45 = int_to_ptr.vmem [resolvable:$true] %s44
      %47 = dma.hbm_to_vmem [thread:$0]  %s2, 16, %s45, [#allocation6]
    $region13: #{modified_model_forward.1} parent=1 // pred_fallthru
      _
    // Predicated region
    $region14: #{modified_model_forward.1} parent=1 // pred_check
      _
    $region15: #{modified_model_forward.1} parent=1 // pred_check_branch
      %49 = sbr.rel (0) target = $region17
    $region16: #{modified_model_forward.1} parent=1 // pred_region
      %s51 = ssub.s32 64, 64
      %52 = vsyncadd [#allocation9], %s51
      %s54 = sshll.u32 [#allocation8], 4
      %s55 = int_to_ptr.vmem [resolvable:$true] %s54
      %57 = dma.hbm_to_vmem [thread:$0]  %s3, 64, %s55, [#allocation9]
    $region17: #{modified_model_forward.1} parent=1 // pred_fallthru
      _
    // Predicated region
    $region18: #{modified_model_forward.1} parent=1 // pred_check
      _
    $region19: #{modified_model_forward.1} parent=1 // pred_check_branch
      %59 = sbr.rel (0) target = $region21
    $region20: #{modified_model_forward.1} parent=1 // pred_region
      %s61 = ssub.s32 16, 16
      %62 = vsyncadd [#allocation9], %s61
      %s64 = sshll.u32 [#allocation10], 4
      %s65 = int_to_ptr.vmem [resolvable:$true] %s64
      %67 = dma.hbm_to_vmem [thread:$0]  %s4, 16, %s65, [#allocation9]
    $region21: #{modified_model_forward.1} parent=1 // pred_fallthru
      _
    // Predicated region
    $region22: #{modified_model_forward.1} parent=1 // pred_check
      _
    $region23: #{modified_model_forward.1} parent=1 // pred_check_branch
      %69 = sbr.rel (0) target = $region25
    $region24: #{modified_model_forward.1} parent=1 // pred_region
      %70 = dma.done [#allocation3], 4096
    $region25: #{modified_model_forward.1} parent=1 // pred_fallthru
      _
    // Predicated region
    $region26: #{modified_model_forward.1} parent=1 // pred_check
      _
    $region27: #{modified_model_forward.1} parent=1 // pred_check_branch
      %72 = sbr.rel (0) target = $region29
    $region28: #{modified_model_forward.1} parent=1 // pred_region
      %73 = dma.done [#allocation6], 320
    $region29: #{modified_model_forward.1} parent=1 // pred_fallthru
      _
    // Predicated region
    $region30: #{modified_model_forward.1} parent=1 // pred_check
      _
    $region31: #{modified_model_forward.1} parent=1 // pred_check_branch
      %75 = sbr.rel (0) target = $region33
    $region32: #{modified_model_forward.1} parent=1 // pred_region
      %76 = dma.done [#allocation6], 16
    $region33: #{modified_model_forward.1} parent=1 // pred_fallthru
      _
    // Predicated region
    $region34: #{modified_model_forward.1} parent=1 // pred_check
      _
    $region35: #{modified_model_forward.1} parent=1 // pred_check_branch
      %78 = sbr.rel (0) target = $region37
    $region36: #{modified_model_forward.1} parent=1 // pred_region
      %79 = dma.done [#allocation9], 64
    $region37: #{modified_model_forward.1} parent=1 // pred_fallthru
      _
    // Predicated region
    $region38: #{modified_model_forward.1} parent=1 // pred_check
      _
    $region39: #{modified_model_forward.1} parent=1 // pred_check_branch
      %81 = sbr.rel (0) target = $region41
    $region40: #{modified_model_forward.1} parent=1 // pred_region
      %82 = dma.done [#allocation9], 16
    $region41: #{modified_model_forward.1} parent=1 // pred_fallthru
      _
    %v84 = vld [vmem:[#allocation2] sm:$0xf]
    %v85 = vld [vmem:[#allocation2 + $0x4] sm:$0xf]
    %v86 = vld [vmem:[#allocation2 + $0x8] sm:$0xf]
    %v87 = vld [vmem:[#allocation2 + $0xc] sm:$0xf]
    %v88 = vld [vmem:[#allocation2 + $0x10] sm:$0xf]
    %v89 = vld [vmem:[#allocation2 + $0x14] sm:$0xf]
    %v90 = vld [vmem:[#allocation2 + $0x18] sm:$0xf]
    %v91 = vld [vmem:[#allocation2 + $0x1c] sm:$0xf]
    %v92 = vld [vmem:[#allocation2 + $0x20] sm:$0xf]
    %v93 = vld [vmem:[#allocation2 + $0x24] sm:$0xf]
    %v94 = vld [vmem:[#allocation2 + $0x28] sm:$0xf]
    %v95 = vld [vmem:[#allocation2 + $0x2c] sm:$0xf]
    %v96 = vld [vmem:[#allocation2 + $0x30] sm:$0xf]
    %v97 = vld [vmem:[#allocation2 + $0x34] sm:$0xf]
    %v98 = vld [vmem:[#allocation2 + $0x38] sm:$0xf]
    %v99 = vld [vmem:[#allocation2 + $0x3c] sm:$0xf]
    %v100 = vld [vmem:[#allocation2 + $0x40] sm:$0xf]
    %v101 = vld [vmem:[#allocation2 + $0x44] sm:$0xf]
    %v102 = vld [vmem:[#allocation2 + $0x48] sm:$0xf]
    %v103 = vld [vmem:[#allocation2 + $0x4c] sm:$0xf]
    %v104 = vld [vmem:[#allocation2 + $0x50] sm:$0xf]
    %v105 = vld [vmem:[#allocation2 + $0x54] sm:$0xf]
    %v106 = vld [vmem:[#allocation2 + $0x58] sm:$0xf]
    %v107 = vld [vmem:[#allocation2 + $0x5c] sm:$0xf]
    %v108 = vld [vmem:[#allocation2 + $0x60] sm:$0xf]
    %v109 = vld [vmem:[#allocation2 + $0x64] sm:$0xf]
    %v110 = vld [vmem:[#allocation2 + $0x68] sm:$0xf]
    %v111 = vld [vmem:[#allocation2 + $0x6c] sm:$0xf]
    %v112 = vld [vmem:[#allocation2 + $0x70] sm:$0xf]
    %v113 = vld [vmem:[#allocation2 + $0x74] sm:$0xf]
    %v114 = vld [vmem:[#allocation2 + $0x78] sm:$0xf]
    %v115 = vld [vmem:[#allocation2 + $0x7c] sm:$0xf]
    %v116 = vld [vmem:[#allocation2 + $0x80] sm:$0xf]
    %v117 = vld [vmem:[#allocation2 + $0x84] sm:$0xf]
    %v118 = vld [vmem:[#allocation2 + $0x88] sm:$0xf]
    %v119 = vld [vmem:[#allocation2 + $0x8c] sm:$0xf]
    %v120 = vld [vmem:[#allocation2 + $0x90] sm:$0xf]
    %v121 = vld [vmem:[#allocation2 + $0x94] sm:$0xf]
    %v122 = vld [vmem:[#allocation2 + $0x98] sm:$0xf]
    %v123 = vld [vmem:[#allocation2 + $0x9c] sm:$0xf]
    %v124 = vld [vmem:[#allocation2 + $0xa0] sm:$0xf]
    %v125 = vld [vmem:[#allocation2 + $0xa4] sm:$0xf]
    %v126 = vld [vmem:[#allocation2 + $0xa8] sm:$0xf]
    %v127 = vld [vmem:[#allocation2 + $0xac] sm:$0xf]
    %v128 = vld [vmem:[#allocation2 + $0xb0] sm:$0xf]
    %v129 = vld [vmem:[#allocation2 + $0xb4] sm:$0xf]
    %v130 = vld [vmem:[#allocation2 + $0xb8] sm:$0xf]
    %v131 = vld [vmem:[#allocation2 + $0xbc] sm:$0xf]
    %v132 = vld [vmem:[#allocation2 + $0xc0] sm:$0xf]
    %v133 = vld [vmem:[#allocation2 + $0xc4] sm:$0xf]
    %v134 = vld [vmem:[#allocation2 + $0xc8] sm:$0xf]
    %v135 = vld [vmem:[#allocation2 + $0xcc] sm:$0xf]
    %v136 = vld [vmem:[#allocation2 + $0xd0] sm:$0xf]
    %v137 = vld [vmem:[#allocation2 + $0xd4] sm:$0xf]
    %v138 = vld [vmem:[#allocation2 + $0xd8] sm:$0xf]
    %v139 = vld [vmem:[#allocation2 + $0xdc] sm:$0xf]
    %v140 = vld [vmem:[#allocation2 + $0xe0] sm:$0xf]
    %v141 = vld [vmem:[#allocation2 + $0xe4] sm:$0xf]
    %v142 = vld [vmem:[#allocation2 + $0xe8] sm:$0xf]
    %v143 = vld [vmem:[#allocation2 + $0xec] sm:$0xf]
    %v144 = vld [vmem:[#allocation2 + $0xf0] sm:$0xf]
    %v145 = vld [vmem:[#allocation2 + $0xf4] sm:$0xf]
    %v146 = vld [vmem:[#allocation2 + $0xf8] sm:$0xf]
    %v147 = vld [vmem:[#allocation2 + $0xfc] sm:$0xf]
    %v148 = vld [vmem:[#allocation5] sm:$0xf]
    %v149 = vld [vmem:[#allocation5 + $0x4] sm:$0xf]
    %v150 = vld [vmem:[#allocation5 + $0x8] sm:$0xf]
    %v151 = vld [vmem:[#allocation5 + $0xc] sm:$0xf]
    %v152 = vld [vmem:[#allocation5 + $0x10] sm:$0x3]
    %v153 = vld [vmem:[#allocation7] sm:$0x1]
    %v155 = vlaneseq
    %v156 = vshrl.u32 %v155, 7
    %v157 = vsub.s32 0, %v156
    %v158 = vrot.slane %v153, %v157
    %v224 = vunpack.c.l.b16 %v84
    %v225 = vunpack.c.l.b16 %v85
    %v226 = vunpack.c.l.b16 %v86
    %v227 = vunpack.c.l.b16 %v87
    %v228 = vunpack.c.l.b16 %v88
    %v229 = vunpack.c.l.b16 %v89
    %v230 = vunpack.c.l.b16 %v90
    %v231 = vunpack.c.l.b16 %v91
    %v232 = vunpack.c.l.b16 %v92
    %v233 = vunpack.c.l.b16 %v93
    %v234 = vunpack.c.l.b16 %v94
    %v235 = vunpack.c.l.b16 %v95
    %v236 = vunpack.c.l.b16 %v96
    %v237 = vunpack.c.l.b16 %v97
    %v238 = vunpack.c.l.b16 %v98
    %v239 = vunpack.c.l.b16 %v99
    %v240 = vunpack.c.l.b16 %v100
    %v241 = vunpack.c.l.b16 %v101
    %v242 = vunpack.c.l.b16 %v102
    %v243 = vunpack.c.l.b16 %v103
    %v244 = vunpack.c.l.b16 %v104
    %v245 = vunpack.c.l.b16 %v105
    %v246 = vunpack.c.l.b16 %v106
    %v247 = vunpack.c.l.b16 %v107
    %v248 = vunpack.c.l.b16 %v108
    %v249 = vunpack.c.l.b16 %v109
    %v250 = vunpack.c.l.b16 %v110
    %v251 = vunpack.c.l.b16 %v111
    %v252 = vunpack.c.l.b16 %v112
    %v253 = vunpack.c.l.b16 %v113
    %v254 = vunpack.c.l.b16 %v114
    %v255 = vunpack.c.l.b16 %v115
    %v256 = vunpack.c.l.b16 %v116
    %v257 = vunpack.c.l.b16 %v117
    %v258 = vunpack.c.l.b16 %v118
    %v259 = vunpack.c.l.b16 %v119
    %v260 = vunpack.c.l.b16 %v120
    %v261 = vunpack.c.l.b16 %v121
    %v262 = vunpack.c.l.b16 %v122
    %v263 = vunpack.c.l.b16 %v123
    %v264 = vunpack.c.l.b16 %v124
    %v265 = vunpack.c.l.b16 %v125
    %v266 = vunpack.c.l.b16 %v126
    %v267 = vunpack.c.l.b16 %v127
    %v268 = vunpack.c.l.b16 %v128
    %v269 = vunpack.c.l.b16 %v129
    %v270 = vunpack.c.l.b16 %v130
    %v271 = vunpack.c.l.b16 %v131
    %v272 = vunpack.c.l.b16 %v132
    %v273 = vunpack.c.l.b16 %v133
    %v274 = vunpack.c.l.b16 %v134
    %v275 = vunpack.c.l.b16 %v135
    %v276 = vunpack.c.l.b16 %v136
    %v277 = vunpack.c.l.b16 %v137
    %v278 = vunpack.c.l.b16 %v138
    %v279 = vunpack.c.l.b16 %v139
    %v280 = vunpack.c.l.b16 %v140
    %v281 = vunpack.c.l.b16 %v141
    %v282 = vunpack.c.l.b16 %v142
    %v283 = vunpack.c.l.b16 %v143
    %v284 = vunpack.c.l.b16 %v144
    %v285 = vunpack.c.l.b16 %v145
    %v286 = vunpack.c.l.b16 %v146
    %v287 = vunpack.c.l.b16 %v147
    %v288 = vpack.c.b16 %v225, %v224
    %v289 = vpack.c.b16 %v227, %v226
    %v290 = vpack.c.b16 %v229, %v228
    %v291 = vpack.c.b16 %v231, %v230
    %v292 = vpack.c.b16 %v233, %v232
    %v293 = vpack.c.b16 %v235, %v234
    %v294 = vpack.c.b16 %v237, %v236
    %v295 = vpack.c.b16 %v239, %v238
    %v296 = vpack.c.b16 %v241, %v240
    %v297 = vpack.c.b16 %v243, %v242
    %v298 = vpack.c.b16 %v245, %v244
    %v299 = vpack.c.b16 %v247, %v246
    %v300 = vpack.c.b16 %v249, %v248
    %v301 = vpack.c.b16 %v251, %v250
    %v302 = vpack.c.b16 %v253, %v252
    %v303 = vpack.c.b16 %v255, %v254
    %v304 = vpack.c.b16 %v257, %v256
    %v305 = vpack.c.b16 %v259, %v258
    %v306 = vpack.c.b16 %v261, %v260
    %v307 = vpack.c.b16 %v263, %v262
    %v308 = vpack.c.b16 %v265, %v264
    %v309 = vpack.c.b16 %v267, %v266
    %v310 = vpack.c.b16 %v269, %v268
    %v311 = vpack.c.b16 %v271, %v270
    %v312 = vpack.c.b16 %v273, %v272
    %v313 = vpack.c.b16 %v275, %v274
    %v314 = vpack.c.b16 %v277, %v276
    %v315 = vpack.c.b16 %v279, %v278
    %v316 = vpack.c.b16 %v281, %v280
    %v317 = vpack.c.b16 %v283, %v282
    %v318 = vpack.c.b16 %v285, %v284
    %v319 = vpack.c.b16 %v287, %v286
    %v325 = vunpack.c.l.b16 %v148
    %v326 = vunpack.c.l.b16 %v149
    %v327 = vunpack.c.l.b16 %v150
    %v328 = vunpack.c.l.b16 %v151
    %v329 = vunpack.c.l.b16 %v152
    %v330 = vpack.c.b16 %v326, %v325
    %v331 = vpack.c.b16 %v328, %v327
    %v332 = vpack.c.b16 %v329, %v329
    %vm335 = vcmask 293888
    %v337 = vsel %vm335, %v288, 0
    %v340 = vsel %vm335, %v289, 0
    %v343 = vsel %vm335, %v290, 0
    %v346 = vsel %vm335, %v291, 0
    %v349 = vsel %vm335, %v292, 0
    %v352 = vsel %vm335, %v293, 0
    %v355 = vsel %vm335, %v294, 0
    %v358 = vsel %vm335, %v295, 0
    %v361 = vsel %vm335, %v296, 0
    %v364 = vsel %vm335, %v297, 0
    %v367 = vsel %vm335, %v298, 0
    %v370 = vsel %vm335, %v299, 0
    %v373 = vsel %vm335, %v300, 0
    %v376 = vsel %vm335, %v301, 0
    %v379 = vsel %vm335, %v302, 0
    %v382 = vsel %vm335, %v303, 0
    %v385 = vsel %vm335, %v304, 0
    %v388 = vsel %vm335, %v305, 0
    %v391 = vsel %vm335, %v306, 0
    %v394 = vsel %vm335, %v307, 0
    %v397 = vsel %vm335, %v308, 0
    %v400 = vsel %vm335, %v309, 0
    %v403 = vsel %vm335, %v310, 0
    %v406 = vsel %vm335, %v311, 0
    %v409 = vsel %vm335, %v312, 0
    %v412 = vsel %vm335, %v313, 0
    %v415 = vsel %vm335, %v314, 0
    %v418 = vsel %vm335, %v315, 0
    %v421 = vsel %vm335, %v316, 0
    %v424 = vsel %vm335, %v317, 0
    %v427 = vsel %vm335, %v318, 0
    %v430 = vsel %vm335, %v319, 0
    %vm432 = vcmask 1041408
    %v434 = vsel %vm432, %v332, 0
    %436 = vmatprep.subr.bf16.mxu0 0
    %437 = vmatpush1.bf16.msra.mxu0 %v330
    %438 = vmatprep.subr.bf16.mxu0 0
    %439 = vmatpush1.bf16.msra.mxu0 %v331
    %440 = vmatprep.subr.bf16.mxu0 0
    %441 = vmatpush1.bf16.msra.mxu0 %v434
    %442 = vmatprep.subr.bf16.mxu0 0
    %443 = vmatpush1.bf16.msra.mxu0 0
    %444 = vmatprep.subr.bf16.mxu0 0
    %445 = vmatpush1.bf16.msra.mxu0 0
    %446 = vmatprep.subr.bf16.mxu0 0
    %447 = vmatpush1.bf16.msra.mxu0 0
    %448 = vmatprep.subr.bf16.mxu0 0
    %449 = vmatpush1.bf16.msra.mxu0 0
    %450 = vmatprep.subr.bf16.mxu0 0
    %451 = vmatpush1.bf16.msra.mxu0 0
    %452 = vmatprep.subr.bf16.mxu0 0
    %453 = vmatpush1.bf16.msra.mxu0 0
    %454 = vmatprep.subr.bf16.mxu0 0
    %455 = vmatpush1.bf16.msra.mxu0 0
    %456 = vmatprep.subr.bf16.mxu0 0
    %457 = vmatpush1.bf16.msra.mxu0 0
    %458 = vmatprep.subr.bf16.mxu0 0
    %459 = vmatpush1.bf16.msra.mxu0 0
    %460 = vmatprep.subr.bf16.mxu0 0
    %461 = vmatpush1.bf16.msra.mxu0 0
    %462 = vmatprep.subr.bf16.mxu0 0
    %463 = vmatpush1.bf16.msra.mxu0 0
    %464 = vmatprep.subr.bf16.mxu0 0
    %465 = vmatpush1.bf16.msra.mxu0 0
    %466 = vmatprep.subr.bf16.mxu0 0
    %467 = vmatpush1.bf16.msra.mxu0 0
    %468 = vmatprep.mubr.bf16.mxu0 0
    %469 = vmatmul.mubr.bf16.gmra.mrb[0].mxu0 %v337
    %v470 = vpop.f32.mrb[0].mxu0
    %v471 = vadd.f32 %v158, %v470
    %v472 = vpop.f32.mrb[0].mxu0
    %v473 = vpop.f32.mrb[0].mxu0
    %v474 = vadd.f32 %v158, %v473
    %v475 = vpop.f32.mrb[0].mxu0
    %476 = vmatprep.mubr.bf16.mxu0 0
    %477 = vmatmul.mubr.bf16.gmra.mrb[0].mxu0 %v340
    %v478 = vpop.f32.mrb[0].mxu0
    %v479 = vadd.f32 %v158, %v478
    %v480 = vpop.f32.mrb[0].mxu0
    %v481 = vpop.f32.mrb[0].mxu0
    %v482 = vadd.f32 %v158, %v481
    %v483 = vpop.f32.mrb[0].mxu0
    %484 = vmatprep.mubr.bf16.mxu0 0
    %485 = vmatmul.mubr.bf16.gmra.mrb[0].mxu0 %v343
    %v486 = vpop.f32.mrb[0].mxu0
    %v487 = vadd.f32 %v158, %v486
    %v488 = vpop.f32.mrb[0].mxu0
    %v489 = vpop.f32.mrb[0].mxu0
    %v490 = vadd.f32 %v158, %v489
    %v491 = vpop.f32.mrb[0].mxu0
    %492 = vmatprep.mubr.bf16.mxu0 0
    %493 = vmatmul.mubr.bf16.gmra.mrb[0].mxu0 %v346
    %v494 = vpop.f32.mrb[0].mxu0
    %v495 = vadd.f32 %v158, %v494
    %v496 = vpop.f32.mrb[0].mxu0
    %v497 = vpop.f32.mrb[0].mxu0
    %v498 = vadd.f32 %v158, %v497
    %v499 = vpop.f32.mrb[0].mxu0
    %500 = vmatprep.mubr.bf16.mxu0 0
    %501 = vmatmul.mubr.bf16.gmra.mrb[0].mxu0 %v349
    %v502 = vpop.f32.mrb[0].mxu0
    %v503 = vadd.f32 %v158, %v502
    %v504 = vpop.f32.mrb[0].mxu0
    %v505 = vpop.f32.mrb[0].mxu0
    %v506 = vadd.f32 %v158, %v505
    %v507 = vpop.f32.mrb[0].mxu0
    %508 = vmatprep.mubr.bf16.mxu0 0
    %509 = vmatmul.mubr.bf16.gmra.mrb[0].mxu0 %v352
    %v510 = vpop.f32.mrb[0].mxu0
    %v511 = vadd.f32 %v158, %v510
    %v512 = vpop.f32.mrb[0].mxu0
    %v513 = vpop.f32.mrb[0].mxu0
    %v514 = vadd.f32 %v158, %v513
    %v515 = vpop.f32.mrb[0].mxu0
    %516 = vmatprep.mubr.bf16.mxu0 0
    %517 = vmatmul.mubr.bf16.gmra.mrb[0].mxu0 %v355
    %v518 = vpop.f32.mrb[0].mxu0
    %v519 = vadd.f32 %v158, %v518
    %v520 = vpop.f32.mrb[0].mxu0
    %v521 = vpop.f32.mrb[0].mxu0
    %v522 = vadd.f32 %v158, %v521
    %v523 = vpop.f32.mrb[0].mxu0
    %524 = vmatprep.mubr.bf16.mxu0 0
    %525 = vmatmul.mubr.bf16.gmra.mrb[0].mxu0 %v358
    %v526 = vpop.f32.mrb[0].mxu0
    %v527 = vadd.f32 %v158, %v526
    %v528 = vpop.f32.mrb[0].mxu0
    %v529 = vpop.f32.mrb[0].mxu0
    %v530 = vadd.f32 %v158, %v529
    %v531 = vpop.f32.mrb[0].mxu0
    %532 = vmatprep.mubr.bf16.mxu0 0
    %533 = vmatmul.mubr.bf16.gmra.mrb[0].mxu0 %v361
    %v534 = vpop.f32.mrb[0].mxu0
    %v535 = vadd.f32 %v158, %v534
    %v536 = vpop.f32.mrb[0].mxu0
    %v537 = vpop.f32.mrb[0].mxu0
    %v538 = vadd.f32 %v158, %v537
    %v539 = vpop.f32.mrb[0].mxu0
    %540 = vmatprep.mubr.bf16.mxu0 0
    %541 = vmatmul.mubr.bf16.gmra.mrb[0].mxu0 %v364
    %v542 = vpop.f32.mrb[0].mxu0
    %v543 = vadd.f32 %v158, %v542
    %v544 = vpop.f32.mrb[0].mxu0
    %v545 = vpop.f32.mrb[0].mxu0
    %v546 = vadd.f32 %v158, %v545
    %v547 = vpop.f32.mrb[0].mxu0
    %548 = vmatprep.mubr.bf16.mxu0 0
    %549 = vmatmul.mubr.bf16.gmra.mrb[0].mxu0 %v367
    %v550 = vpop.f32.mrb[0].mxu0
    %v551 = vadd.f32 %v158, %v550
    %v552 = vpop.f32.mrb[0].mxu0
    %v553 = vpop.f32.mrb[0].mxu0
    %v554 = vadd.f32 %v158, %v553
    %v555 = vpop.f32.mrb[0].mxu0
    %556 = vmatprep.mubr.bf16.mxu0 0
    %557 = vmatmul.mubr.bf16.gmra.mrb[0].mxu0 %v370
    %v558 = vpop.f32.mrb[0].mxu0
    %v559 = vadd.f32 %v158, %v558
    %v560 = vpop.f32.mrb[0].mxu0
    %v561 = vpop.f32.mrb[0].mxu0
    %v562 = vadd.f32 %v158, %v561
    %v563 = vpop.f32.mrb[0].mxu0
    %564 = vmatprep.mubr.bf16.mxu0 0
    %565 = vmatmul.mubr.bf16.gmra.mrb[0].mxu0 %v373
    %v566 = vpop.f32.mrb[0].mxu0
    %v567 = vadd.f32 %v158, %v566
    %v568 = vpop.f32.mrb[0].mxu0
    %v569 = vpop.f32.mrb[0].mxu0
    %v570 = vadd.f32 %v158, %v569
    %v571 = vpop.f32.mrb[0].mxu0
    %572 = vmatprep.mubr.bf16.mxu0 0
    %573 = vmatmul.mubr.bf16.gmra.mrb[0].mxu0 %v376
    %v574 = vpop.f32.mrb[0].mxu0
    %v575 = vadd.f32 %v158, %v574
    %v576 = vpop.f32.mrb[0].mxu0
    %v577 = vpop.f32.mrb[0].mxu0
    %v578 = vadd.f32 %v158, %v577
    %v579 = vpop.f32.mrb[0].mxu0
    %580 = vmatprep.mubr.bf16.mxu0 0
    %581 = vmatmul.mubr.bf16.gmra.mrb[0].mxu0 %v379
    %v582 = vpop.f32.mrb[0].mxu0
    %v583 = vadd.f32 %v158, %v582
    %v584 = vpop.f32.mrb[0].mxu0
    %v585 = vpop.f32.mrb[0].mxu0
    %v586 = vadd.f32 %v158, %v585
    %v587 = vpop.f32.mrb[0].mxu0
    %588 = vmatprep.mubr.bf16.mxu0 0
    %589 = vmatmul.mubr.bf16.gmra.mrb[0].mxu0 %v382
    %v590 = vpop.f32.mrb[0].mxu0
    %v591 = vadd.f32 %v158, %v590
    %v592 = vpop.f32.mrb[0].mxu0
    %v593 = vpop.f32.mrb[0].mxu0
    %v594 = vadd.f32 %v158, %v593
    %v595 = vpop.f32.mrb[0].mxu0
    %596 = vmatprep.mubr.bf16.mxu0 0
    %597 = vmatmul.mubr.bf16.gmra.mrb[0].mxu0 %v385
    %v598 = vpop.f32.mrb[0].mxu0
    %v599 = vadd.f32 %v158, %v598
    %v600 = vpop.f32.mrb[0].mxu0
    %v601 = vpop.f32.mrb[0].mxu0
    %v602 = vadd.f32 %v158, %v601
    %v603 = vpop.f32.mrb[0].mxu0
    %604 = vmatprep.mubr.bf16.mxu0 0
    %605 = vmatmul.mubr.bf16.gmra.mrb[0].mxu0 %v388
    %v606 = vpop.f32.mrb[0].mxu0
    %v607 = vadd.f32 %v158, %v606
    %v608 = vpop.f32.mrb[0].mxu0
    %v609 = vpop.f32.mrb[0].mxu0
    %v610 = vadd.f32 %v158, %v609
    %v611 = vpop.f32.mrb[0].mxu0
    %612 = vmatprep.mubr.bf16.mxu0 0
    %613 = vmatmul.mubr.bf16.gmra.mrb[0].mxu0 %v391
    %v614 = vpop.f32.mrb[0].mxu0
    %v615 = vadd.f32 %v158, %v614
    %v616 = vpop.f32.mrb[0].mxu0
    %v617 = vpop.f32.mrb[0].mxu0
    %v618 = vadd.f32 %v158, %v617
    %v619 = vpop.f32.mrb[0].mxu0
    %620 = vmatprep.mubr.bf16.mxu0 0
    %621 = vmatmul.mubr.bf16.gmra.mrb[0].mxu0 %v394
    %v622 = vpop.f32.mrb[0].mxu0
    %v623 = vadd.f32 %v158, %v622
    %v624 = vpop.f32.mrb[0].mxu0
    %v625 = vpop.f32.mrb[0].mxu0
    %v626 = vadd.f32 %v158, %v625
    %v627 = vpop.f32.mrb[0].mxu0
    %628 = vmatprep.mubr.bf16.mxu0 0
    %629 = vmatmul.mubr.bf16.gmra.mrb[0].mxu0 %v397
    %v630 = vpop.f32.mrb[0].mxu0
    %v631 = vadd.f32 %v158, %v630
    %v632 = vpop.f32.mrb[0].mxu0
    %v633 = vpop.f32.mrb[0].mxu0
    %v634 = vadd.f32 %v158, %v633
    %v635 = vpop.f32.mrb[0].mxu0
    %636 = vmatprep.mubr.bf16.mxu0 0
    %637 = vmatmul.mubr.bf16.gmra.mrb[0].mxu0 %v400
    %v638 = vpop.f32.mrb[0].mxu0
    %v639 = vadd.f32 %v158, %v638
    %v640 = vpop.f32.mrb[0].mxu0
    %v641 = vpop.f32.mrb[0].mxu0
    %v642 = vadd.f32 %v158, %v641
    %v643 = vpop.f32.mrb[0].mxu0
    %644 = vmatprep.mubr.bf16.mxu0 0
    %645 = vmatmul.mubr.bf16.gmra.mrb[0].mxu0 %v403
    %v646 = vpop.f32.mrb[0].mxu0
    %v647 = vadd.f32 %v158, %v646
    %v648 = vpop.f32.mrb[0].mxu0
    %v649 = vpop.f32.mrb[0].mxu0
    %v650 = vadd.f32 %v158, %v649
    %v651 = vpop.f32.mrb[0].mxu0
    %652 = vmatprep.mubr.bf16.mxu0 0
    %653 = vmatmul.mubr.bf16.gmra.mrb[0].mxu0 %v406
    %v654 = vpop.f32.mrb[0].mxu0
    %v655 = vadd.f32 %v158, %v654
    %v656 = vpop.f32.mrb[0].mxu0
    %v657 = vpop.f32.mrb[0].mxu0
    %v658 = vadd.f32 %v158, %v657
    %v659 = vpop.f32.mrb[0].mxu0
    %660 = vmatprep.mubr.bf16.mxu0 0
    %661 = vmatmul.mubr.bf16.gmra.mrb[0].mxu0 %v409
    %v662 = vpop.f32.mrb[0].mxu0
    %v663 = vadd.f32 %v158, %v662
    %v664 = vpop.f32.mrb[0].mxu0
    %v665 = vpop.f32.mrb[0].mxu0
    %v666 = vadd.f32 %v158, %v665
    %v667 = vpop.f32.mrb[0].mxu0
    %668 = vmatprep.mubr.bf16.mxu0 0
    %669 = vmatmul.mubr.bf16.gmra.mrb[0].mxu0 %v412
    %v670 = vpop.f32.mrb[0].mxu0
    %v671 = vadd.f32 %v158, %v670
    %v672 = vpop.f32.mrb[0].mxu0
    %v673 = vpop.f32.mrb[0].mxu0
    %v674 = vadd.f32 %v158, %v673
    %v675 = vpop.f32.mrb[0].mxu0
    %676 = vmatprep.mubr.bf16.mxu0 0
    %677 = vmatmul.mubr.bf16.gmra.mrb[0].mxu0 %v415
    %v678 = vpop.f32.mrb[0].mxu0
    %v679 = vadd.f32 %v158, %v678
    %v680 = vpop.f32.mrb[0].mxu0
    %v681 = vpop.f32.mrb[0].mxu0
    %v682 = vadd.f32 %v158, %v681
    %v683 = vpop.f32.mrb[0].mxu0
    %684 = vmatprep.mubr.bf16.mxu0 0
    %685 = vmatmul.mubr.bf16.gmra.mrb[0].mxu0 %v418
    %v686 = vpop.f32.mrb[0].mxu0
    %v687 = vadd.f32 %v158, %v686
    %v688 = vpop.f32.mrb[0].mxu0
    %v689 = vpop.f32.mrb[0].mxu0
    %v690 = vadd.f32 %v158, %v689
    %v691 = vpop.f32.mrb[0].mxu0
    %692 = vmatprep.mubr.bf16.mxu0 0
    %693 = vmatmul.mubr.bf16.gmra.mrb[0].mxu0 %v421
    %v694 = vpop.f32.mrb[0].mxu0
    %v695 = vadd.f32 %v158, %v694
    %v696 = vpop.f32.mrb[0].mxu0
    %v697 = vpop.f32.mrb[0].mxu0
    %v698 = vadd.f32 %v158, %v697
    %v699 = vpop.f32.mrb[0].mxu0
    %700 = vmatprep.mubr.bf16.mxu0 0
    %701 = vmatmul.mubr.bf16.gmra.mrb[0].mxu0 %v424
    %v702 = vpop.f32.mrb[0].mxu0
    %v703 = vadd.f32 %v158, %v702
    %v704 = vpop.f32.mrb[0].mxu0
    %v705 = vpop.f32.mrb[0].mxu0
    %v706 = vadd.f32 %v158, %v705
    %v707 = vpop.f32.mrb[0].mxu0
    %708 = vmatprep.mubr.bf16.mxu0 0
    %709 = vmatmul.mubr.bf16.gmra.mrb[0].mxu0 %v427
    %v710 = vpop.f32.mrb[0].mxu0
    %v711 = vadd.f32 %v158, %v710
    %v712 = vpop.f32.mrb[0].mxu0
    %v713 = vpop.f32.mrb[0].mxu0
    %v714 = vadd.f32 %v158, %v713
    %v715 = vpop.f32.mrb[0].mxu0
    %716 = vmatprep.mubr.bf16.mxu0 0
    %717 = vmatmul.mubr.bf16.gmra.mrb[0].mxu0 %v430
    %v718 = vpop.f32.mrb[0].mxu0
    %v719 = vadd.f32 %v158, %v718
    %v720 = vpop.f32.mrb[0].mxu0
    %v721 = vpop.f32.mrb[0].mxu0
    %v722 = vadd.f32 %v158, %v721
    %v723 = vpop.f32.mrb[0].mxu0
    %724 = vdwg.mxu0
    %v725 = vmax.f32 %v471, 0.0
    %v726 = vmax.f32 %v474, 0.0
    %v727 = vmax.f32 %v479, 0.0
    %v728 = vmax.f32 %v482, 0.0
    %v729 = vmax.f32 %v487, 0.0
    %v730 = vmax.f32 %v490, 0.0
    %v731 = vmax.f32 %v495, 0.0
    %v732 = vmax.f32 %v498, 0.0
    %v733 = vmax.f32 %v503, 0.0
    %v734 = vmax.f32 %v506, 0.0
    %v735 = vmax.f32 %v511, 0.0
    %v736 = vmax.f32 %v514, 0.0
    %v737 = vmax.f32 %v519, 0.0
    %v738 = vmax.f32 %v522, 0.0
    %v739 = vmax.f32 %v527, 0.0
    %v740 = vmax.f32 %v530, 0.0
    %v741 = vmax.f32 %v535, 0.0
    %v742 = vmax.f32 %v538, 0.0
    %v743 = vmax.f32 %v543, 0.0
    %v744 = vmax.f32 %v546, 0.0
    %v745 = vmax.f32 %v551, 0.0
    %v746 = vmax.f32 %v554, 0.0
    %v747 = vmax.f32 %v559, 0.0
    %v748 = vmax.f32 %v562, 0.0
    %v749 = vmax.f32 %v567, 0.0
    %v750 = vmax.f32 %v570, 0.0
    %v751 = vmax.f32 %v575, 0.0
    %v752 = vmax.f32 %v578, 0.0
    %v753 = vmax.f32 %v583, 0.0
    %v754 = vmax.f32 %v586, 0.0
    %v755 = vmax.f32 %v591, 0.0
    %v756 = vmax.f32 %v594, 0.0
    %v757 = vmax.f32 %v599, 0.0
    %v758 = vmax.f32 %v602, 0.0
    %v759 = vmax.f32 %v607, 0.0
    %v760 = vmax.f32 %v610, 0.0
    %v761 = vmax.f32 %v615, 0.0
    %v762 = vmax.f32 %v618, 0.0
    %v763 = vmax.f32 %v623, 0.0
    %v764 = vmax.f32 %v626, 0.0
    %v765 = vmax.f32 %v631, 0.0
    %v766 = vmax.f32 %v634, 0.0
    %v767 = vmax.f32 %v639, 0.0
    %v768 = vmax.f32 %v642, 0.0
    %v769 = vmax.f32 %v647, 0.0
    %v770 = vmax.f32 %v650, 0.0
    %v771 = vmax.f32 %v655, 0.0
    %v772 = vmax.f32 %v658, 0.0
    %v773 = vmax.f32 %v663, 0.0
    %v774 = vmax.f32 %v666, 0.0
    %v775 = vmax.f32 %v671, 0.0
    %v776 = vmax.f32 %v674, 0.0
    %v777 = vmax.f32 %v679, 0.0
    %v778 = vmax.f32 %v682, 0.0
    %v779 = vmax.f32 %v687, 0.0
    %v780 = vmax.f32 %v690, 0.0
    %v781 = vmax.f32 %v695, 0.0
    %v782 = vmax.f32 %v698, 0.0
    %v783 = vmax.f32 %v703, 0.0
    %v784 = vmax.f32 %v706, 0.0
    %v785 = vmax.f32 %v711, 0.0
    %v786 = vmax.f32 %v714, 0.0
    %v787 = vmax.f32 %v719, 0.0
    %v788 = vmax.f32 %v722, 0.0
    %vm789 = vcmask 64512
    %v790 = vsel %vm789, %v725, 0.0
    %v791 = vsel %vm789, %v726, 0.0
    %v792 = vadd.f32 %v790, %v791
    %v793 = vsel %vm789, %v727, 0.0
    %v794 = vadd.f32 %v792, %v793
    %v795 = vsel %vm789, %v728, 0.0
    %v796 = vadd.f32 %v794, %v795
    %v797 = vsel %vm789, %v729, 0.0
    %v798 = vadd.f32 %v796, %v797
    %v799 = vsel %vm789, %v730, 0.0
    %v800 = vadd.f32 %v798, %v799
    %v801 = vsel %vm789, %v731, 0.0
    %v802 = vadd.f32 %v800, %v801
    %v803 = vsel %vm789, %v732, 0.0
    %v804 = vadd.f32 %v802, %v803
    %v805 = vsel %vm789, %v733, 0.0
    %v806 = vadd.f32 %v804, %v805
    %v807 = vsel %vm789, %v734, 0.0
    %v808 = vadd.f32 %v806, %v807
    %v809 = vsel %vm789, %v735, 0.0
    %v810 = vadd.f32 %v808, %v809
    %v811 = vsel %vm789, %v736, 0.0
    %v812 = vadd.f32 %v810, %v811
    %v813 = vsel %vm789, %v737, 0.0
    %v814 = vadd.f32 %v812, %v813
    %v815 = vsel %vm789, %v738, 0.0
    %v816 = vadd.f32 %v814, %v815
    %v817 = vsel %vm789, %v739, 0.0
    %v818 = vadd.f32 %v816, %v817
    %v819 = vsel %vm789, %v740, 0.0
    %v820 = vadd.f32 %v818, %v819
    %v821 = vsel %vm789, %v741, 0.0
    %v822 = vadd.f32 %v820, %v821
    %v823 = vsel %vm789, %v742, 0.0
    %v824 = vadd.f32 %v822, %v823
    %v825 = vsel %vm789, %v743, 0.0
    %v826 = vadd.f32 %v824, %v825
    %v827 = vsel %vm789, %v744, 0.0
    %v828 = vadd.f32 %v826, %v827
    %v829 = vsel %vm789, %v745, 0.0
    %v830 = vadd.f32 %v828, %v829
    %v831 = vsel %vm789, %v746, 0.0
    %v832 = vadd.f32 %v830, %v831
    %v833 = vsel %vm789, %v747, 0.0
    %v834 = vadd.f32 %v832, %v833
    %v835 = vsel %vm789, %v748, 0.0
    %v836 = vadd.f32 %v834, %v835
    %v837 = vsel %vm789, %v749, 0.0
    %v838 = vadd.f32 %v836, %v837
    %v839 = vsel %vm789, %v750, 0.0
    %v840 = vadd.f32 %v838, %v839
    %v841 = vsel %vm789, %v751, 0.0
    %v842 = vadd.f32 %v840, %v841
    %v843 = vsel %vm789, %v752, 0.0
    %v844 = vadd.f32 %v842, %v843
    %v845 = vsel %vm789, %v753, 0.0
    %v846 = vadd.f32 %v844, %v845
    %v847 = vsel %vm789, %v754, 0.0
    %v848 = vadd.f32 %v846, %v847
    %v849 = vsel %vm789, %v755, 0.0
    %v850 = vadd.f32 %v848, %v849
    %v851 = vsel %vm789, %v756, 0.0
    %v852 = vadd.f32 %v850, %v851
    %v853 = vrot.slane %v852, 4
    %v854 = vadd.f32 %v852, %v853
    %v855 = vrot.slane %v854, 2
    %v856 = vadd.f32 %v854, %v855
    %v857 = vrot.slane %v856, 1
    %v858 = vadd.f32 %v856, %v857
    %v859 = vsel %vm789, %v757, 0.0
    %v860 = vsel %vm789, %v758, 0.0
    %v861 = vadd.f32 %v859, %v860
    %v862 = vsel %vm789, %v759, 0.0
    %v863 = vadd.f32 %v861, %v862
    %v864 = vsel %vm789, %v760, 0.0
    %v865 = vadd.f32 %v863, %v864
    %v866 = vsel %vm789, %v761, 0.0
    %v867 = vadd.f32 %v865, %v866
    %v868 = vsel %vm789, %v762, 0.0
    %v869 = vadd.f32 %v867, %v868
    %v870 = vsel %vm789, %v763, 0.0
    %v871 = vadd.f32 %v869, %v870
    %v872 = vsel %vm789, %v764, 0.0
    %v873 = vadd.f32 %v871, %v872
    %v874 = vsel %vm789, %v765, 0.0
    %v875 = vadd.f32 %v873, %v874
    %v876 = vsel %vm789, %v766, 0.0
    %v877 = vadd.f32 %v875, %v876
    %v878 = vsel %vm789, %v767, 0.0
    %v879 = vadd.f32 %v877, %v878
    %v880 = vsel %vm789, %v768, 0.0
    %v881 = vadd.f32 %v879, %v880
    %v882 = vsel %vm789, %v769, 0.0
    %v883 = vadd.f32 %v881, %v882
    %v884 = vsel %vm789, %v770, 0.0
    %v885 = vadd.f32 %v883, %v884
    %v886 = vsel %vm789, %v771, 0.0
    %v887 = vadd.f32 %v885, %v886
    %v888 = vsel %vm789, %v772, 0.0
    %v889 = vadd.f32 %v887, %v888
    %v890 = vsel %vm789, %v773, 0.0
    %v891 = vadd.f32 %v889, %v890
    %v892 = vsel %vm789, %v774, 0.0
    %v893 = vadd.f32 %v891, %v892
    %v894 = vsel %vm789, %v775, 0.0
    %v895 = vadd.f32 %v893, %v894
    %v896 = vsel %vm789, %v776, 0.0
    %v897 = vadd.f32 %v895, %v896
    %v898 = vsel %vm789, %v777, 0.0
    %v899 = vadd.f32 %v897, %v898
    %v900 = vsel %vm789, %v778, 0.0
    %v901 = vadd.f32 %v899, %v900
    %v902 = vsel %vm789, %v779, 0.0
    %v903 = vadd.f32 %v901, %v902
    %v904 = vsel %vm789, %v780, 0.0
    %v905 = vadd.f32 %v903, %v904
    %v906 = vsel %vm789, %v781, 0.0
    %v907 = vadd.f32 %v905, %v906
    %v908 = vsel %vm789, %v782, 0.0
    %v909 = vadd.f32 %v907, %v908
    %v910 = vsel %vm789, %v783, 0.0
    %v911 = vadd.f32 %v909, %v910
    %v912 = vsel %vm789, %v784, 0.0
    %v913 = vadd.f32 %v911, %v912
    %v914 = vsel %vm789, %v785, 0.0
    %v915 = vadd.f32 %v913, %v914
    %v916 = vsel %vm789, %v786, 0.0
    %v917 = vadd.f32 %v915, %v916
    %v918 = vsel %vm789, %v787, 0.0
    %v919 = vadd.f32 %v917, %v918
    %v920 = vsel %vm789, %v788, 0.0
    %v921 = vadd.f32 %v919, %v920
    %v922 = vrot.slane %v921, 4
    %v923 = vadd.f32 %v921, %v922
    %v924 = vrot.slane %v923, 2
    %v925 = vadd.f32 %v923, %v924
    %v926 = vrot.slane %v925, 1
    %v927 = vadd.f32 %v925, %v926
    %v928 = vpack.c.bf16 %v858, %v858
    %v929 = vpack.c.bf16 %v927, %v927
    %v930 = vld [vmem:[#allocation8] sm:$0xf]
    %v931 = vld [vmem:[#allocation10] sm:$0x1]
    %v933 = vlaneseq
    %v934 = vshrl.u32 %v933, 7
    %v935 = vsub.s32 0, %v934
    %v936 = vrot.slane %v931, %v935
    %v940 = vunpack.c.l.b16 %v928
    %v941 = vunpack.c.l.b16 %v929
    %vm942 = vcmask 1041409
    %v943 = vsel %vm942, %v941, %v940
    %v944 = vpack.c.b16 %v943, %v943
    %v946 = vsel %vm789, %v944, 0
    %vm948 = vcmask 1043456
    %v950 = vsel %vm948, %v930, 0
    %952 = vmatprep.subr.bf16.mxu0 0
    %953 = vmatpush1.bf16.msra.mxu0 %v950
    %954 = vmatprep.subr.bf16.mxu0 0
    %955 = vmatpush1.bf16.msra.mxu0 0
    %956 = vmatprep.subr.bf16.mxu0 0
    %957 = vmatpush1.bf16.msra.mxu0 0
    %958 = vmatprep.subr.bf16.mxu0 0
    %959 = vmatpush1.bf16.msra.mxu0 0
    %960 = vmatprep.subr.bf16.mxu0 0
    %961 = vmatpush1.bf16.msra.mxu0 0
    %962 = vmatprep.subr.bf16.mxu0 0
    %963 = vmatpush1.bf16.msra.mxu0 0
    %964 = vmatprep.subr.bf16.mxu0 0
    %965 = vmatpush1.bf16.msra.mxu0 0
    %966 = vmatprep.subr.bf16.mxu0 0
    %967 = vmatpush1.bf16.msra.mxu0 0
    %968 = vmatprep.subr.bf16.mxu0 0
    %969 = vmatpush1.bf16.msra.mxu0 0
    %970 = vmatprep.subr.bf16.mxu0 0
    %971 = vmatpush1.bf16.msra.mxu0 0
    %972 = vmatprep.subr.bf16.mxu0 0
    %973 = vmatpush1.bf16.msra.mxu0 0
    %974 = vmatprep.subr.bf16.mxu0 0
    %975 = vmatpush1.bf16.msra.mxu0 0
    %976 = vmatprep.subr.bf16.mxu0 0
    %977 = vmatpush1.bf16.msra.mxu0 0
    %978 = vmatprep.subr.bf16.mxu0 0
    %979 = vmatpush1.bf16.msra.mxu0 0
    %980 = vmatprep.subr.bf16.mxu0 0
    %981 = vmatpush1.bf16.msra.mxu0 0
    %982 = vmatprep.subr.bf16.mxu0 0
    %983 = vmatpush1.bf16.msra.mxu0 0
    %984 = vmatprep.mubr.bf16.mxu0 0
    %985 = vmatmul.mubr.bf16.gmra.mrb[0].mxu0 %v946
    %v986 = vpop.f32.mrb[0].mxu0
    %v987 = vadd.f32 %v936, %v986
    %v988 = vpop.f32.mrb[0].mxu0
    %v989 = vpop.f32.mrb[0].mxu0
    %v990 = vpop.f32.mrb[0].mxu0
    %991 = vdwg.mxu0
    %992 = vst [vmem:[#allocation11] sm:$0x3] %v987
    // Predicated region
    $region42: #{modified_model_forward.1} parent=1 // pred_check
      _
    $region43: #{modified_model_forward.1} parent=1 // pred_check_branch
      %994 = sbr.rel (0) target = $region45
    $region44: #{modified_model_forward.1} parent=1 // pred_region
      %s996 = ssub.s32 32, 32
      %997 = vsyncadd [#allocation4], %s996
      %s999 = sshll.u32 [#allocation11], 4
      %s1000 = int_to_ptr.vmem [resolvable:$true] %s999
      %1002 = dma.vmem_to_hbm [thread:$0]  %s1000, 32, %s5, [#allocation4]
    $region45: #{modified_model_forward.1} parent=1 // pred_fallthru
      _
    // Predicated region
    $region46: #{modified_model_forward.1} parent=1 // pred_check
      _
    $region47: #{modified_model_forward.1} parent=1 // pred_check_branch
      %1004 = sbr.rel (0) target = $region49
    $region48: #{modified_model_forward.1} parent=1 // pred_region
      %1005 = dma.done [#allocation4], 32
    $region49: #{modified_model_forward.1} parent=1 // pred_fallthru
      _
    %1006 = vsyncpa [#allocation3], 1
    %1007 = vsyncpa [#allocation6], 1
    %1008 = vsyncpa [#allocation9], 1
    %1009 = vsyncpa [#allocation4], 1

</llo_original>
